<compile_context>
chip_gen: v7x
topology: tpu7x:2x2x1
jax: 0.10.0
libtpu: 0.0.40
codegen_flags: <defaults>
</compile_context>

<pallas_src>
import jax
import jax.numpy as jnp
from jax.experimental import pallas as pl
from jax.experimental.pallas import tpu as pltpu


# ----------------------------- Pallas kernel -------------------------------

def _cvr_head_kernel(xt_ref, ub_ref, out_ref):
    """One lane-dense batch tile.

      xt_ref : (S, n_tile) f32  folded per-position item contributions (transposed)
      ub_ref : (1, n_tile) f32  folded user contribution + bias
      out_ref: (1, n_tile) f32  sigmoid predictions (lane-dense row)
    """
    s = jnp.sum(xt_ref[...], axis=0, keepdims=True)      # one sublane reduce / vreg
    out_ref[...] = jax.nn.sigmoid(s + ub_ref[...])       # VPU add + EUP sigmoid


def _round_up(x, m):
    return -(-x // m) * m


def _pick_lane_tile(B):
    # >=2 grid steps whenever B >= 256 so v7x's two TensorCores both get work
    # and DMA/compute pipeline; cap keeps the double-buffered working set at a
    # few MB (well under every generation's scoped-VMEM default).
    half = _round_up(max(1, -(-B // 2)), 128)
    return int(max(128, min(65536, half)))


def cvr_head_pallas(item_vals_T, ub_row):
    """item_vals_T: (S, B) f32 folded item contributions (already LUT-gathered).
       ub_row:      (1, B) f32 folded user contribution + bias.
    Returns sigmoid predictions, shape (B, 1) f32.
    """
    S, B = item_vals_T.shape
    n_tile = _pick_lane_tile(B)
    B_pad = _round_up(B, n_tile)
    if B_pad != B:
        # Only the tiny folded-value arrays (~(S+1)*4 B/row) are padded -- the
        # raw index tensors / embedding tables are never copied.
        item_vals_T = jnp.pad(item_vals_T, ((0, 0), (0, B_pad - B)))
        ub_row = jnp.pad(ub_row, ((0, 0), (0, B_pad - B)))

    out = pl.pallas_call(
        _cvr_head_kernel,
        out_shape=jax.ShapeDtypeStruct((1, B_pad), jnp.float32),
        grid=(B_pad // n_tile,),
        in_specs=[
            pl.BlockSpec((S, n_tile), lambda i: (0, i)),   # lane-dense item slab
            pl.BlockSpec((1, n_tile), lambda i: (0, i)),   # lane-dense user+bias row
        ],
        out_specs=pl.BlockSpec((1, n_tile), lambda i: (0, i)),
        compiler_params=pltpu.CompilerParams(
            dimension_semantics=("parallel",),   # shard batch tiles over v7x's 2 TCs
            # No vmem_limit_bytes: working set is a few MB, defaults suffice.
        ),
    )(item_vals_T, ub_row)
    return out[0, :B].reshape(B, 1)


# ------------------------- Model (params + glue) ---------------------------

class ConvertionPredictorJax:
    """JAX/Pallas port of models/LR.py::ConvertionPredictor."""

    def __init__(self, data_cfg, key):
        self.cfg = data_cfg
        c_dim = data_cfg["C_embedding_dim"]
        cat_dims = list(data_cfg["cat_embedding_dim_list"])
        u_dim = data_cfg["U_embedding_dim"]
        in_dim = c_dim + sum(cat_dims) + u_dim

        keys = jax.random.split(key, 4 + len(cat_dims))
        k_c, k_u, k_w, k_b = keys[0], keys[1], keys[2], keys[3]
        k_cats = keys[4:]

        # f32 tables (nothing wide is streamed anymore, so no bf16 needed).
        self.C_emb = jax.random.normal(k_c, (data_cfg["C_vocab"], c_dim),
                                       jnp.float32) * 0.1
        self.cat_embs = [
            jax.random.normal(k, (v, d), jnp.float32) * 0.1
            for k, v, d in zip(k_cats, data_cfg["cat_vocab_list"], cat_dims)
        ]
        self.U_emb = jax.random.normal(k_u, (data_cfg["U_vocab"], u_dim),
                                       jnp.float32) * 0.1

        # nn.Linear(in_dim, 1): split the weight to match the concat order
        # cat((C, cat_1, ..., cat_n) summed over S, u).
        bound = 1.0 / (in_dim ** 0.5)
        w = jax.random.uniform(k_w, (in_dim,), jnp.float32, -bound, bound)
        self.b = jax.random.uniform(k_b, (1,), jnp.float32, -bound, bound)

        offs = 0
        self.w_c = w[offs:offs + c_dim]; offs += c_dim
        self.w_cats = []
        for d in cat_dims:
            self.w_cats.append(w[offs:offs + d]); offs += d
        self.w_u = w[offs:]

        self._fwd = jax.jit(self._forward)

    def _forward(self, U, C, cat):
        # Fold the single-output Linear into per-table scalar LUTs (tiny
        # matvecs; constant-folded by XLA under jit).
        lut_c = self.C_emb @ self.w_c                              # (Vc,)
        lut_cats = [t @ w for t, w in zip(self.cat_embs, self.w_cats)]
        lut_u = self.U_emb @ self.w_u                              # (Vu,)

        # Per-position folded contributions: the gathers + adds fuse into one
        # XLA fusion producing a single (B, S) f32 array (~S*4 B/row of HBM),
        # instead of the old (B, S, D_item) slab round-trip.
        vals = jnp.take(lut_c, C, axis=0)                          # (B, S)
        for i, lut in enumerate(lut_cats):
            vals = vals + jnp.take(lut, cat[:, :, i], axis=0)
        item_T = vals.T                                            # (S, B) lane-dense
        ub = (jnp.take(lut_u, U, axis=0) + self.b[0]).reshape(1, -1)  # (1, B)

        return cvr_head_pallas(item_T, ub)

    def __call__(self, U, C, cat):
        return self._fwd(U, C, cat)


# -------------------------------- main --------------------------------------

if __name__ == "__main__":
    data_cfg = {
        "C_embedding_dim": 16,
        "cat_embedding_dim_list": [8, 8],
        "U_embedding_dim": 16,
        "C_vocab": 64,
        "cat_vocab_list": [32, 32],
        "U_vocab": 64,
    }

    B, S = 256, 8       # 256 rows -> two lane-dense grid steps of 128
    key = jax.random.PRNGKey(0)
    k_model, k_u, k_c, k_cat = jax.random.split(key, 4)

    model = ConvertionPredictorJax(data_cfg, k_model)

    U = jax.random.randint(k_u, (B,), 0, data_cfg["U_vocab"])
    C = jax.random.randint(k_c, (B, S), 0, data_cfg["C_vocab"])
    cat = jnp.stack(
        [
            jax.random.randint(kk, (B, S), 0, v)
            for kk, v in zip(
                jax.random.split(k_cat, len(data_cfg["cat_vocab_list"])),
                data_cfg["cat_vocab_list"],
            )
        ],
        axis=-1,
    )

    pred = model(U, C, cat)
    jax.block_until_ready(pred)
    assert pred.shape == (B, 1), pred.shape

    # Plain-JAX reference with the UNfused math (embeddings -> concat -> sum ->
    # linear -> sigmoid), all f32.
    tp = jnp.concatenate(
        [jnp.take(model.C_emb, C, axis=0)]
        + [jnp.take(t, cat[:, :, i], axis=0) for i, t in enumerate(model.cat_embs)],
        axis=-1,
    )                                                   # (B, S, D_item)
    u = jnp.take(model.U_emb, U, axis=0)                # (B, D_u)
    h = jnp.concatenate([tp.sum(1), u], axis=1)
    w_full = jnp.concatenate([model.w_c] + model.w_cats + [model.w_u])
    ref = jax.nn.sigmoid(h @ w_full[:, None] + model.b)
    assert jnp.allclose(pred, ref, atol=1e-5, rtol=1e-5), (pred[:4], ref[:4])

    print("KERNEL_OK")
</pallas_src>

<mosaic_0001>
module attributes {stable_mosaic.version = 11 : i64} {
  func.func @_cvr_head_kernel(%arg0: i32, %arg1: memref<8x128xf32, #tpu.memory_space<vmem>>, %arg2: memref<1x128xf32, #tpu.memory_space<vmem>>, %arg3: memref<1x128xf32, #tpu.memory_space<vmem>>) attributes {dimension_semantics = [#tpu.dimension_semantics<parallel>], iteration_bounds = array<i64: 2>, scalar_prefetch = 0 : i64, scratch_operands = 0 : i64, tpu.core_type = #tpu.core_type<tc>, window_params = [{transform_indices = @transform_0, window_bounds = array<i64: 8, 128>}, {transform_indices = @transform_1, window_bounds = array<i64: 1, 128>}, {transform_indices = @transform_2, window_bounds = array<i64: 1, 128>}]} {
    %c0 = arith.constant 0 : index
    %c0_0 = arith.constant 0 : index
    %0 = vector.load %arg1[%c0, %c0_0] : memref<8x128xf32, #tpu.memory_space<vmem>>, vector<8x128xf32>
    %cst = arith.constant dense<0.000000e+00> : vector<128xf32>
    %1 = vector.multi_reduction <add>, %0, %cst [0] : vector<8x128xf32> to vector<128xf32>
    %2 = vector.shape_cast %1 : vector<128xf32> to vector<1x128xf32>
    %c0_1 = arith.constant 0 : index
    %c0_2 = arith.constant 0 : index
    %3 = vector.load %arg2[%c0_1, %c0_2] : memref<1x128xf32, #tpu.memory_space<vmem>>, vector<1x128xf32>
    %4 = arith.addf %2, %3 : vector<1x128xf32>
    %5 = arith.negf %4 : vector<1x128xf32>
    %6 = math.exp %5 : vector<1x128xf32>
    %cst_3 = arith.constant 1.000000e+00 : f32
    %7 = vector.broadcast %cst_3 : f32 to vector<1x128xf32>
    %8 = arith.addf %7, %6 : vector<1x128xf32>
    %9 = arith.divf %7, %8 : vector<1x128xf32>
    %c0_4 = arith.constant 0 : index
    %c0_5 = arith.constant 0 : index
    %10 = vector.load %arg3[%c0_4, %c0_5] : memref<1x128xf32, #tpu.memory_space<vmem>>, vector<1x128xf32>
    tpu.vector_store %arg3[%c0_4, %c0_5], %9 {strides = array<i32>} : memref<1x128xf32, #tpu.memory_space<vmem>>, vector<1x128xf32>,
    return
  }
  func.func @transform_0(%arg0: i32) -> (i32, i32) {
    %c0_i32 = arith.constant 0 : i32
    %c0_i32_0 = arith.constant 0 : i32
    return %c0_i32, %arg0 : i32, i32
  }
  func.func @transform_1(%arg0: i32) -> (i32, i32) {
    %c0_i32 = arith.constant 0 : i32
    %c0_i32_0 = arith.constant 0 : i32
    return %c0_i32, %arg0 : i32, i32
  }
  func.func @transform_2(%arg0: i32) -> (i32, i32) {
    %c0_i32 = arith.constant 0 : i32
    %c0_i32_0 = arith.constant 0 : i32
    return %c0_i32, %arg0 : i32, i32
  }
}

</mosaic_0001>

<llo_original>
// kernel: _forward.1
$region0: #{_forward.1}
  #allocation0 [shape = 'u32[]', space=smem, size = 0x4, offset = 0x4, fixed_abs, tag = 'smem constant byte address 0x4 - core index']
  #allocation1 [shape = 'u32[144,128]{1,0:T(1,128)}', space=vmem, size = 0x12000, scoped, tag = 'internal scratch']
  %s0 = inlined_call_operand.vmem [shape: f32[8,256], index: 0, kind: input, shape index: {}]
  %s1 = inlined_call_operand.vmem [shape: f32[1,256], index: 1, kind: input, shape index: {}]
  %s2 = inlined_call_operand.hbm [shape: f32[1,256], index: 2, kind: output, shape index: {}]
  %s3 = sld [smem:[#allocation0]]
  $region41: #{_forward.1} parent=0
    _
  %s5 = ssub.s32 1, %s3
  %s6 = scalar_select 0, %s5, %s3
  $region1: #{_forward.1} parent=0
    #allocation2 [shape = 'u8[1024]{0}', space=vmem, size = 0x400, scoped, tag = 'output window, operand 0']
    #allocation3 [shape = 's32[2]{0}', space=sflag, size = 0x8, scoped, tag = 'scoped memory for _forward.1']
    %7 = vsyncpa [#allocation3], 0
    %s8 = scalar_lea.sflag [#allocation3], 1
    %9 = vsyncpa %s8, 0
    loop: start=0, step=1, limit=4
    $region2: #{_forward.1} parent=1 // loop_pre_header
      _
    $region3: #{_forward.1} parent=1 // loop_header
      %s11 = sphi 0, %s15
      %p12 = scmp.ge.s32.totalorder %s11, 4
      %s21 = sphi 0, %s23
      %s24 = sphi 0, %s21
      %s25 = sphi 0, %s24
      %s41 = sphi 0, %s25
      %s47 = sphi 0, %s49
      %s50 = sphi 0, %s47
      %s51 = sphi 0, %s50
      %s67 = sphi 0, %s51
      %s73 = sphi 0, %s75
      %s76 = sphi 0, %s73
      %s77 = sphi 0, %s76
      %s93 = sphi 0, %s77
    $region4: #{_forward.1} parent=1 // loop_header_branch
      %14 = sbr.rel (%p12) target = $region8
    $region5: #{_forward.1} parent=1 // loop_body
      %s16 = ssub.s32 %s11, 1
      %s17 = ssub.s32 %s11, 2
      %s18 = sadd.s32 %s11, 1
      %s19 = ssub.s32 %s11, %s18
      %p20 = scmp.eq.s32.totalorder %s19, 0
      %s22 = sadd.s32 %s21, 1
      %s23 = scalar_select %p20, %s21, %s22
      %p26 = pneg %p20
      %p27 = scmp.eq.s32.totalorder %s11, 1
      %p28 = por %p26, %p27
      %p29 = scmp.ne.s32.totalorder %s21, %s24
      %p30 = scmp.eq.s32.totalorder %s11, 0
      %p31 = por %p29, %p30
      %p32 = scmp.ne.s32.totalorder %s21, %s24
      %p33 = scmp.eq.s32.totalorder %s16, 1
      %p34 = por %p32, %p33
      %p35 = scmp.ne.s32.totalorder %s24, %s25
      %p36 = scmp.eq.s32.totalorder %s16, 0
      %p37 = por %p35, %p36
      %p38 = scmp.ne.s32.totalorder %s24, %s25
      %p39 = scmp.eq.s32.totalorder %s17, 1
      %p40 = por %p38, %p39
      %p42 = scmp.ne.s32.totalorder %s25, %s41
      %p43 = scmp.eq.s32.totalorder %s17, 0
      %p44 = por %p42, %p43
      %s45 = ssub.s32 %s11, %s18
      %p46 = scmp.eq.s32.totalorder %s45, 0
      %s48 = sadd.s32 %s47, 1
      %s49 = scalar_select %p46, %s47, %s48
      %p52 = pneg %p46
      %p53 = scmp.eq.s32.totalorder %s11, 1
      %p54 = por %p52, %p53
      %p55 = scmp.ne.s32.totalorder %s47, %s50
      %p56 = scmp.eq.s32.totalorder %s11, 0
      %p57 = por %p55, %p56
      %p58 = scmp.ne.s32.totalorder %s47, %s50
      %p59 = scmp.eq.s32.totalorder %s16, 1
      %p60 = por %p58, %p59
      %p61 = scmp.ne.s32.totalorder %s50, %s51
      %p62 = scmp.eq.s32.totalorder %s16, 0
      %p63 = por %p61, %p62
      %p64 = scmp.ne.s32.totalorder %s50, %s51
      %p65 = scmp.eq.s32.totalorder %s17, 1
      %p66 = por %p64, %p65
      %p68 = scmp.ne.s32.totalorder %s51, %s67
      %p69 = scmp.eq.s32.totalorder %s17, 0
      %p70 = por %p68, %p69
      %s71 = ssub.s32 %s11, %s18
      %p72 = scmp.eq.s32.totalorder %s71, 0
      %s74 = sadd.s32 %s73, 1
      %s75 = scalar_select %p72, %s73, %s74
      %p78 = pneg %p72
      %p79 = scmp.eq.s32.totalorder %s11, 1
      %p80 = por %p78, %p79
      %p81 = scmp.ne.s32.totalorder %s73, %s76
      %p82 = scmp.eq.s32.totalorder %s11, 0
      %p83 = por %p81, %p82
      %p84 = scmp.ne.s32.totalorder %s73, %s76
      %p85 = scmp.eq.s32.totalorder %s16, 1
      %p86 = por %p84, %p85
      %p87 = scmp.ne.s32.totalorder %s76, %s77
      %p88 = scmp.eq.s32.totalorder %s16, 0
      %p89 = por %p87, %p88
      %p90 = scmp.ne.s32.totalorder %s76, %s77
      %p91 = scmp.eq.s32.totalorder %s17, 1
      %p92 = por %p90, %p91
      %p94 = scmp.ne.s32.totalorder %s77, %s93
      %p95 = scmp.eq.s32.totalorder %s17, 0
      %p96 = por %p94, %p95
      %p97 = scmp.le.s32.totalorder 1, %s11
      %p98 = scmp.lt.s32.totalorder %s11, 3
      %p99 = pnand %p97, %p98
      %p100 = pneg %p99
      // Predicated region
      $region9: #{_forward.1} parent=5 // pred_check
        _
      $region10: #{_forward.1} parent=5 // pred_check_branch
        %102 = sbr.rel (%p99) target = $region12
      $region11: #{_forward.1} parent=5 // pred_region
        %s103 = ssub.s32 %s11, 1
      $region12: #{_forward.1} parent=5 // pred_fallthru
        _
      %p104 = scmp.lt.s32.totalorder %s11, 2
      // Predicated region
      $region13: #{_forward.1} parent=5 // pred_check
        %p105 = pneg %p104
      $region14: #{_forward.1} parent=5 // pred_check_branch
        %107 = sbr.rel (%p105) target = $region16
      $region15: #{_forward.1} parent=5 // pred_region
        // Predicated region
        $region17: #{_forward.1} parent=15 // pred_check
          %p108 = pneg %p31
        $region18: #{_forward.1} parent=15 // pred_check_branch
          %110 = sbr.rel (%p108) target = $region20
        $region19: #{_forward.1} parent=15 // pred_region
          %p111 = scmp.lt.s32.totalorder %s11, 1
          %s112 = scalar_select %p111, %s11, 1
          %s113 = smul.addr %s112, 8
          %s114 = scalar_lea.vmem %s0, %s113
        $region20: #{_forward.1} parent=15 // pred_fallthru
          _
        // Predicated region
        $region21: #{_forward.1} parent=15 // pred_check
          %p115 = pneg %p57
        $region22: #{_forward.1} parent=15 // pred_check_branch
          %117 = sbr.rel (%p115) target = $region24
        $region23: #{_forward.1} parent=15 // pred_region
          %p118 = scmp.lt.s32.totalorder %s11, 1
          %s119 = scalar_select %p118, %s11, 1
          %s120 = scalar_lea.vmem %s1, %s119
        $region24: #{_forward.1} parent=15 // pred_fallthru
          _
      $region16: #{_forward.1} parent=5 // pred_fallthru
        _
      %p121 = scmp.le.s32.totalorder 1, %s11
      %p122 = scmp.lt.s32.totalorder %s11, 3
      %p123 = pnand %p121, %p122
      %p124 = pneg %p123
      // Predicated region
      $region25: #{_forward.1} parent=5 // pred_check
        _
      $region26: #{_forward.1} parent=5 // pred_check_branch
        %126 = sbr.rel (%p123) target = $region28
      $region27: #{_forward.1} parent=5 // pred_region
        %s127 = ssub.s32 %s11, 1
        %p128 = scmp.lt.s32.totalorder %s16, 1
        %s129 = scalar_select %p128, %s16, 1
        %s130 = smul.addr %s129, 8
        %s131 = scalar_lea.vmem %s0, %s130
        %p132 = pneg %p37
        %p133 = pneg %p34
        %p134 = scmp.lt.s32.totalorder %s16, 1
        %s135 = scalar_select %p134, %s16, 1
        %s136 = scalar_lea.vmem %s1, %s135
        %p137 = pneg %p63
        %p138 = pneg %p60
        %p139 = pneg %p89
        %p140 = pneg %p86
        %s141 = sand.u32 %s76, 1
        %s142 = scalar_lea.sflag [#allocation3], %s141
        %s143 = sand.u32 %s76, 1
        %s144 = scalar_lea.vmem [#allocation2], %s143
        %p145 = scmp.lt.s32.totalorder %s16, 1
        %s146 = scalar_select %p145, %s16, 1
        %s147 = smul.addr %s146, 8
        %s148 = scalar_lea.vmem %s0, %s147
        %p149 = scmp.lt.s32.totalorder %s16, 1
        %s150 = scalar_select %p149, %s16, 1
        %s151 = scalar_lea.vmem %s1, %s150
        %v152 = vld [vmem:[%s148] sm:$0xff]
        %v153 = vrot.slane %v152, 4
        %v154 = vadd.f32 %v152, %v153
        %v155 = vrot.slane %v154, 2
        %v156 = vadd.f32 %v154, %v155
        %v157 = vrot.slane %v156, 1
        %v158 = vadd.f32 %v156, %v157
        %v159 = vld [vmem:[%s151] sm:$0x1]
        %v160 = vadd.f32 %v158, %v159
        %v161 = vxor.u32 %v160, 2147483648
        %v162 = vmul.f32 %v161, 1.442695
        %v163 = vpow.pop %v162
        %v164 = vadd.f32 %v163, 1.0
        %v165 = vrcp.pop %v164
        %v166 = vmul.f32 1.0, %v165
        %167 = vst [vmem:[%s144] sm:$0x1] %v166
        %s168 = sand.u32 %s76, 1
        %s169 = scalar_lea.sflag [#allocation3], %s168
        %s170 = sand.u32 %s76, 1
        %s171 = scalar_lea.vmem [#allocation2], %s170
        // Predicated region
        $region29: #{_forward.1} parent=27 // pred_check
          %p172 = pneg %p86
        $region30: #{_forward.1} parent=27 // pred_check_branch
          %174 = sbr.rel (%p172) target = $region32
        $region31: #{_forward.1} parent=27 // pred_region
          %s176 = ssub.s32 16, 16
          %177 = vsyncadd %s169, %s176
          %s178 = smul.addr %s16, 16
          %s179 = scalar_lea.hbm %s2, %s178
          %s181 = sshll.u32 %s171, 4
          %s182 = int_to_ptr.vmem [resolvable:$true] %s181
          %184 = dma.vmem_to_hbm [thread:$0]  %s182, 16, %s179, %s169
        $region32: #{_forward.1} parent=27 // pred_fallthru
          _
      $region28: #{_forward.1} parent=5 // pred_fallthru
        _
      %p185 = scmp.le.s32.totalorder 2, %s11
      // Predicated region
      $region33: #{_forward.1} parent=5 // pred_check
        %p186 = pneg %p185
      $region34: #{_forward.1} parent=5 // pred_check_branch
        %188 = sbr.rel (%p186) target = $region36
      $region35: #{_forward.1} parent=5 // pred_region
        %s189 = ssub.s32 %s11, 2
        // Predicated region
        $region37: #{_forward.1} parent=35 // pred_check
          %p190 = pneg %p92
        $region38: #{_forward.1} parent=35 // pred_check_branch
          %192 = sbr.rel (%p190) target = $region40
        $region39: #{_forward.1} parent=35 // pred_region
          %s193 = sand.u32 %s77, 1
          %s194 = scalar_lea.sflag [#allocation3], %s193
          %s195 = sand.u32 %s77, 1
          %s196 = scalar_lea.vmem [#allocation2], %s195
          %197 = dma.done %s194, 16
        $region40: #{_forward.1} parent=35 // pred_fallthru
          _
      $region36: #{_forward.1} parent=5 // pred_fallthru
        _
    $region6: #{_forward.1} parent=1 // loop_footer
      %s15 = sadd.s32 1, %s11
    $region7: #{_forward.1} parent=1 // loop_footer_branch
      %10 = sbr.rel target = $region3
    $region8: #{_forward.1} parent=1 // loop_exit
      _
    %198 = vsyncpa [#allocation3], 1
    %s199 = scalar_lea.sflag [#allocation3], 1
    %200 = vsyncpa %s199, 1

</llo_original>
